<compile_context>
chip_gen: v5e
topology: v5e:2x2
jax: 0.10.0
libtpu: 0.0.40
codegen_flags: <defaults>
</compile_context>

<pallas_src>
import jax
import jax.numpy as jnp
from jax import lax
from jax.experimental import pallas as pl
from jax.experimental.pallas import tpu as pltpu

_LANE = 128
_SUBLANE = 8
# Resident working-set target (hidden buffers + temporaries + mask).  Well
# under the 32 MiB scoped-VMEM defaults of v6e/v7x and the limit we request.
_VMEM_BUDGET = 16 << 20


def _hid_bytes_per_elem(itemsize):
    # 2 double-buffered native-dtype blocks + f32 upcast temp (sub-f32 inputs)
    # + f32 masked-product temp.
    return 2 * itemsize + (4 if itemsize < 4 else 0) + 4


def _mask_bytes_per_row(tB):
    # Double-buffered (tB, tS) f32 mask block + worst-case lane-broadcast temp.
    return tB * (2 * 4 + 512)


def _pick_tile_b(B):
    """Batch tile: the (tB, tH) output block needs a sublane dim that is a
    multiple of 8 or the full batch.  tB=8 over a cdiv grid keeps >=2 blocks on
    this parallel axis (v7x has two TensorCores) whenever B > 8."""
    return B if B <= _SUBLANE else _SUBLANE


def _pick_tile_h(H, tB, S, itemsize, want_split):
    """Hidden tile: full H (always legal, no padding) unless it must be split -
    either to keep a >=128-row sequence tile inside the VMEM budget, or to give
    v7x's second TensorCore a parallel block when the batch axis has one."""
    if H <= _LANE:
        return H
    rows = min(S, _LANE)
    budget = _VMEM_BUDGET - rows * _mask_bytes_per_row(tB)
    cap = budget // (rows * tB * _hid_bytes_per_elem(itemsize))
    cap = max(_LANE, cap // _LANE * _LANE)
    if H <= cap and not want_split:
        return H
    if H % _LANE == 0:
        target = min(cap, H // 2 if want_split else H)
        target = max(_LANE, target // _LANE * _LANE)
        for cand in range(target, _LANE - 1, -_LANE):
            if H % cand == 0:
                return cand
        return _LANE
    # H not a multiple of 128: full extent if it fits, else a multiple-of-128
    # tile with a clamped (partial) last block.
    return H if H <= cap else max(_LANE, min(cap, (H // _LANE) * _LANE))


def _pick_tile_s(S, tB, tH, itemsize):
    """Sequence tile: it is the lane dim of the (tB, tS) mask block, so it must
    be a multiple of 128 or the full S.  Sized so the double-buffered hidden
    block plus f32 temporaries stays inside the VMEM budget."""
    if S <= _LANE:
        return S
    per_row = tB * tH * _hid_bytes_per_elem(itemsize) + _mask_bytes_per_row(tB)
    cap = max(_LANE, (_VMEM_BUDGET // per_row) // _LANE * _LANE)
    if S % _LANE == 0:
        # Prefer an exact divisor: no ragged tail block to mask.
        for cand in range(min(cap, S), _LANE - 1, -_LANE):
            if S % cand == 0:
                return cand
        return _LANE
    return min(cap, (S // _LANE) * _LANE)


def _make_kernel(tS, seq_len, needs_tail):
    def kernel(hid_ref, inv_ref, out_ref):
        # hid_ref: (tB, tS, tH) native dtype
        # inv_ref: (tB, tS)     f32, already scaled by 1/clamp(count, 1e-9)
        # out_ref: (tB, tH)     f32, resident across the sequence grid axis
        s = pl.program_id(2)

        @pl.when(s == 0)
        def _init():
            out_ref[...] = jnp.zeros_like(out_ref)

        hid = hid_ref[...].astype(jnp.float32)
        inv = inv_ref[...]

        if needs_tail:
            # The last sequence block is clamped at the array edge: zero the
            # out-of-range rows so OOB garbage (possibly NaN) cannot reach the
            # accumulator.  Traced only when S is not covered exactly.
            base = s * tS
            row2 = base + lax.broadcasted_iota(jnp.int32, (1, tS), 1)
            inv = jnp.where(row2 < seq_len, inv, 0.0)
            row3 = base + lax.broadcasted_iota(jnp.int32, (1, tS, 1), 1)
            hid = jnp.where(row3 < seq_len, hid, 0.0)

        # Masked, denominator-scaled partial sum over this sequence tile,
        # accumulated into the resident f32 output block.
        out_ref[...] += jnp.sum(hid * inv[..., None], axis=1)

    return kernel


def mean_pooling(output_hidden_state, attention_mask):
    """Pallas equivalent of MeanPooling.forward.

    output_hidden_state: [B, S, H]  (f32 / bf16, kept in native dtype in HBM)
    attention_mask:      [B, S]     bool (pooled positions are where it's False)
    returns:             [B, H]     float32
    """
    B, S, H = output_hidden_state.shape
    itemsize = jnp.dtype(output_hidden_state.dtype).itemsize

    # Tiny (B, S) precompute in XLA: invert the mask and fold the clamped
    # 1/count into it -> no denom input, no scratch, no epilogue divide.
    inv2d = jnp.logical_not(attention_mask).astype(jnp.float32)        # (B, S)
    denom = jnp.maximum(jnp.sum(inv2d, axis=1, keepdims=True), 1e-9)   # (B, 1)
    inv_scaled = inv2d / denom                                         # (B, S)

    tB = _pick_tile_b(B)
    nb = pl.cdiv(B, tB)
    tH = _pick_tile_h(H, tB, S, itemsize, want_split=(nb < 2))
    nh = pl.cdiv(H, tH)
    tS = _pick_tile_s(S, tB, tH, itemsize)
    ns = pl.cdiv(S, tS)
    needs_tail = (ns * tS != S)

    kernel = _make_kernel(tS, S, needs_tail)

    out = pl.pallas_call(
        kernel,
        out_shape=jax.ShapeDtypeStruct((B, H), jnp.float32),
        grid_spec=pltpu.PrefetchScalarGridSpec(
            num_scalar_prefetch=0,
            grid=(nb, nh, ns),
            in_specs=[
                pl.BlockSpec((tB, tS, tH), lambda b, h, s: (b, s, h)),
                pl.BlockSpec((tB, tS), lambda b, h, s: (b, s)),
            ],
            out_specs=pl.BlockSpec((tB, tH), lambda b, h, s: (b, h)),
        ),
        compiler_params=pltpu.CompilerParams(
            dimension_semantics=("parallel", "parallel", "arbitrary"),
            vmem_limit_bytes=32 * 1024 * 1024,
        ),
    )(output_hidden_state, inv_scaled)

    return out


if __name__ == "__main__":
    key = jax.random.PRNGKey(0)
    k_hid, k_mask = jax.random.split(key)

    B, S, H = 2, 8, 32
    output_hidden_state = jax.random.normal(k_hid, (B, S, H), dtype=jnp.float32)
    # Boolean attention mask; the module pools over positions where it is False.
    attention_mask = jax.random.bernoulli(k_mask, p=0.5, shape=(B, S))

    result = mean_pooling(output_hidden_state, attention_mask)
    jax.block_until_ready(result)

    # Pure-JAX reference mirroring the PyTorch forward exactly.
    inv = (~attention_mask).astype(jnp.float32)[:, :, None]
    inv = jnp.broadcast_to(inv, output_hidden_state.shape)
    ref = jnp.sum(output_hidden_state * inv, axis=1) / jnp.maximum(
        jnp.sum(inv, axis=1), 1e-9
    )
    assert result.shape == (B, H)
    assert result.dtype == jnp.float32
    assert jnp.allclose(result, ref, atol=1e-5, rtol=1e-5)

    print("KERNEL_OK")
</pallas_src>

<mosaic_0001>
module attributes {stable_mosaic.version = 11 : i64} {
  func.func @kernel(%arg0: i32, %arg1: i32, %arg2: i32, %arg3: memref<2x8x32xf32, #tpu.memory_space<vmem>>, %arg4: memref<2x8xf32, #tpu.memory_space<vmem>>, %arg5: memref<2x32xf32, #tpu.memory_space<vmem>>) attributes {dimension_semantics = [#tpu.dimension_semantics<parallel>, #tpu.dimension_semantics<parallel>, #tpu.dimension_semantics<arbitrary>], iteration_bounds = array<i64: 1, 1, 1>, scalar_prefetch = 0 : i64, scratch_operands = 0 : i64, tpu.core_type = #tpu.core_type<tc>, window_params = [{transform_indices = @transform_0, window_bounds = array<i64: 2, 8, 32>}, {transform_indices = @transform_1, window_bounds = array<i64: 2, 8>}, {transform_indices = @transform_2, window_bounds = array<i64: 2, 32>}]} {
    %c0_i32 = arith.constant 0 : i32
    %0 = arith.cmpi eq, %arg2, %c0_i32 : i32
    %1 = arith.extui %0 : i1 to i32
    %c0_i32_0 = arith.constant 0 : i32
    %2 = arith.cmpi ne, %1, %c0_i32_0 : i32
    scf.if %2 {
      %cst_9 = arith.constant 0.000000e+00 : f32
      %12 = vector.broadcast %cst_9 : f32 to vector<2x32xf32>
      %c0_10 = arith.constant 0 : index
      %c0_11 = arith.constant 0 : index
      %13 = vector.load %arg5[%c0_10, %c0_11] : memref<2x32xf32, #tpu.memory_space<vmem>>, vector<2x32xf32>
      tpu.vector_store %arg5[%c0_10, %c0_11], %12 {strides = array<i32>} : memref<2x32xf32, #tpu.memory_space<vmem>>, vector<2x32xf32>,
    } else {
    }
    %c0 = arith.constant 0 : index
    %c0_1 = arith.constant 0 : index
    %c0_2 = arith.constant 0 : index
    %3 = vector.load %arg3[%c0, %c0_1, %c0_2] : memref<2x8x32xf32, #tpu.memory_space<vmem>>, vector<2x8x32xf32>
    %c0_3 = arith.constant 0 : index
    %c0_4 = arith.constant 0 : index
    %4 = vector.load %arg4[%c0_3, %c0_4] : memref<2x8xf32, #tpu.memory_space<vmem>>, vector<2x8xf32>
    %c0_5 = arith.constant 0 : index
    %c0_6 = arith.constant 0 : index
    %5 = vector.load %arg5[%c0_5, %c0_6] : memref<2x32xf32, #tpu.memory_space<vmem>>, vector<2x32xf32>
    %6 = vector.shape_cast %4 : vector<2x8xf32> to vector<2x8x1xf32>
    %7 = vector.broadcast %6 : vector<2x8x1xf32> to vector<2x8x32xf32>
    %8 = arith.mulf %3, %7 : vector<2x8x32xf32>
    %cst = arith.constant dense<0.000000e+00> : vector<2x32xf32>
    %9 = vector.multi_reduction <add>, %8, %cst [1] : vector<2x8x32xf32> to vector<2x32xf32>
    %10 = arith.addf %5, %9 : vector<2x32xf32>
    %c0_7 = arith.constant 0 : index
    %c0_8 = arith.constant 0 : index
    %11 = vector.load %arg5[%c0_7, %c0_8] : memref<2x32xf32, #tpu.memory_space<vmem>>, vector<2x32xf32>
    tpu.vector_store %arg5[%c0_7, %c0_8], %10 {strides = array<i32>} : memref<2x32xf32, #tpu.memory_space<vmem>>, vector<2x32xf32>,
    return
  }
  func.func @transform_0(%arg0: i32, %arg1: i32, %arg2: i32) -> (i32, i32, i32) {
    %c0_i32 = arith.constant 0 : i32
    return %arg0, %arg2, %arg1 : i32, i32, i32
  }
  func.func @transform_1(%arg0: i32, %arg1: i32, %arg2: i32) -> (i32, i32) {
    %c0_i32 = arith.constant 0 : i32
    return %arg0, %arg2 : i32, i32
  }
  func.func @transform_2(%arg0: i32, %arg1: i32, %arg2: i32) -> (i32, i32) {
    %c0_i32 = arith.constant 0 : i32
    return %arg0, %arg1 : i32, i32
  }
}

</mosaic_0001>

<llo_original>
// kernel: tpu_custom_call.1
$region0: #{tpu_custom_call.1}
  #allocation0 [shape = 'u32[]', space=smem, size = 0x4, offset = 0x4, fixed_abs, tag = 'smem constant byte address 0x4 - core index']
  #allocation1 [shape = 'u32[72,128]{1,0:T(1,128)}', space=vmem, size = 0x9000, scoped, tag = 'internal scratch']
  %s0 = inlined_call_operand.hbm [shape: f32[2,8,32], index: 0, kind: input, shape index: {}]
  %s1 = inlined_call_operand.hbm [shape: f32[2,8], index: 1, kind: input, shape index: {}]
  %s2 = inlined_call_operand.hbm [shape: f32[2,32], index: 2, kind: output, shape index: {}]
  %s3 = sld [smem:[#allocation0]]
  $region30: #{tpu_custom_call.1} parent=0
    _
  %s5 = ssub.s32 1, %s3
  %s6 = scalar_select 0, %s5, %s3
  $region1: #{tpu_custom_call.1} parent=0
    #allocation2 [shape = 'u8[8192]{0}', space=vmem, size = 0x2000, scoped, tag = 'input window, operand 0, single buffered']
    #allocation3 [shape = 's32[1]{0}', space=sflag, size = 0x4, scoped, tag = 'scoped memory for tpu_custom_call.1']
    #allocation4 [shape = 's32[1]{0}', space=sflag, size = 0x4, scoped, tag = 'scoped memory for tpu_custom_call.1']
    #allocation5 [shape = 'u8[1024]{0}', space=vmem, size = 0x400, scoped, tag = 'input window, operand 1, single buffered']
    #allocation6 [shape = 's32[1]{0}', space=sflag, size = 0x4, scoped, tag = 'scoped memory for tpu_custom_call.1']
    #allocation7 [shape = 'u8[1024]{0}', space=vmem, size = 0x400, scoped, tag = 'output window, operand 0, single buffered']
    %7 = vsyncpa [#allocation3], 0
    %8 = vsyncpa [#allocation6], 0
    %9 = vsyncpa [#allocation4], 0
    // Predicated region
    $region2: #{tpu_custom_call.1} parent=1 // pred_check
      _
    $region3: #{tpu_custom_call.1} parent=1 // pred_check_branch
      %11 = sbr.rel (0) target = $region5
    $region4: #{tpu_custom_call.1} parent=1 // pred_region
      %13 = vsyncadd [#allocation3], 0
      %s14 = sshll.u32 %s0, 4
      %s15 = int_to_ptr.hbm [resolvable:$true] %s14
      %s16 = sshll.u32 [#allocation2], 4
      %s17 = int_to_ptr.vmem [resolvable:$true] %s16
      %22 = dma.hbm_to_vmem [thread:$0]  %s15, 256, %s17, [#allocation3], 128, 128, 8
    $region5: #{tpu_custom_call.1} parent=1 // pred_fallthru
      _
    // Predicated region
    $region6: #{tpu_custom_call.1} parent=1 // pred_check
      _
    $region7: #{tpu_custom_call.1} parent=1 // pred_check_branch
      %24 = sbr.rel (0) target = $region9
    $region8: #{tpu_custom_call.1} parent=1 // pred_region
      %26 = vsyncadd [#allocation6], 0
      %s28 = sshll.u32 %s1, 4
      %s29 = int_to_ptr.hbm [resolvable:$true] %s28
      %s30 = sshll.u32 [#allocation5], 4
      %s31 = int_to_ptr.vmem [resolvable:$true] %s30
      %33 = dma.hbm_to_vmem [thread:$0]  %s29, 32, %s31, [#allocation6]
    $region9: #{tpu_custom_call.1} parent=1 // pred_fallthru
      _
    // Predicated region
    $region10: #{tpu_custom_call.1} parent=1 // pred_check
      _
    $region11: #{tpu_custom_call.1} parent=1 // pred_check_branch
      %35 = sbr.rel (0) target = $region13
    $region12: #{tpu_custom_call.1} parent=1 // pred_region
      %37 = dma.done [#allocation3], 256
    $region13: #{tpu_custom_call.1} parent=1 // pred_fallthru
      _
    // Predicated region
    $region14: #{tpu_custom_call.1} parent=1 // pred_check
      _
    $region15: #{tpu_custom_call.1} parent=1 // pred_check_branch
      %39 = sbr.rel (0) target = $region17
    $region16: #{tpu_custom_call.1} parent=1 // pred_region
      %41 = dma.done [#allocation6], 32
    $region17: #{tpu_custom_call.1} parent=1 // pred_fallthru
      _
    %p42 = scmp.eq.s32.totalorder 0, 0
    // Predicated region
    $region18: #{tpu_custom_call.1} parent=1 // pred_check
      %p43 = pneg %p42
    $region19: #{tpu_custom_call.1} parent=1 // pred_check_branch
      %45 = sbr.rel (%p43) target = $region21
    $region20: #{tpu_custom_call.1} parent=1 // pred_region
      %vm46 = vcmask 254976
      %47 = vst.msk [vmem:[#allocation7] sm:$0x3] %vm46, 0.0
    $region21: #{tpu_custom_call.1} parent=1 // pred_fallthru
      _
    %v48 = vld [vmem:[#allocation2] sm:$0xff]
    %v49 = vld [vmem:[#allocation2 + $0x8] sm:$0xff]
    %v50 = vld [vmem:[#allocation5] sm:$0x3]
    %v51 = vld [vmem:[#allocation7] sm:$0x3]
    %v52 = vperm.slane %v50, 0
    %v53 = vlaneseq
    %v54 = vshrl.u32 %v53, 7
    %56 = vset.pattern.permute.xlu0 %v54
    %57 = vperm.xlu0 %56, %v52
    %v58 = vpop.permute.xlu0 %57
    %v59 = vperm.slane %v50, 1
    %v60 = vlaneseq
    %v61 = vshrl.u32 %v60, 7
    %63 = vset.pattern.permute.xlu0 %v61
    %64 = vperm.xlu0 %63, %v59
    %v65 = vpop.permute.xlu0 %64
    %v66 = vmul.f32 %v48, %v58
    %v67 = vmul.f32 %v49, %v65
    %vm68 = vcmask 261120
    %v69 = vsel %vm68, %v66, 0.0
    %v70 = vrot.slane %v69, 4
    %v71 = vadd.f32 %v69, %v70
    %v72 = vrot.slane %v71, 2
    %v73 = vadd.f32 %v71, %v72
    %v74 = vrot.slane %v73, 1
    %v75 = vadd.f32 %v73, %v74
    %v76 = vsel %vm68, %v67, 0.0
    %v77 = vrot.slane %v76, 4
    %v78 = vadd.f32 %v76, %v77
    %v79 = vrot.slane %v78, 2
    %v80 = vadd.f32 %v78, %v79
    %v81 = vrot.slane %v80, 1
    %v82 = vadd.f32 %v80, %v81
    %vm85 = vcmask 1041409
    %v86 = vsel %vm85, %v82, %v75
    %v88 = vadd.f32 %v51, %v86
    %vm89 = vcmask 254976
    %90 = vst.msk [vmem:[#allocation7] sm:$0x3] %vm89, %v88
    // Predicated region
    $region22: #{tpu_custom_call.1} parent=1 // pred_check
      _
    $region23: #{tpu_custom_call.1} parent=1 // pred_check_branch
      %92 = sbr.rel (0) target = $region25
    $region24: #{tpu_custom_call.1} parent=1 // pred_region
      %94 = vsyncadd [#allocation4], 0
      %s96 = sshll.u32 [#allocation7], 4
      %s97 = int_to_ptr.vmem [resolvable:$true] %s96
      %s98 = sshll.u32 %s2, 4
      %s99 = int_to_ptr.hbm [resolvable:$true] %s98
      %101 = dma.vmem_to_hbm [thread:$0]  %s97, 32, %s99, [#allocation4]
    $region25: #{tpu_custom_call.1} parent=1 // pred_fallthru
      _
    // Predicated region
    $region26: #{tpu_custom_call.1} parent=1 // pred_check
      _
    $region27: #{tpu_custom_call.1} parent=1 // pred_check_branch
      %103 = sbr.rel (0) target = $region29
    $region28: #{tpu_custom_call.1} parent=1 // pred_region
      %105 = dma.done [#allocation4], 32
    $region29: #{tpu_custom_call.1} parent=1 // pred_fallthru
      _
    %106 = vsyncpa [#allocation3], 1
    %107 = vsyncpa [#allocation6], 1
    %108 = vsyncpa [#allocation4], 1

</llo_original>
